<compile_context>
chip_gen: v7x
topology: tpu7x:2x2x1
jax: 0.10.0
libtpu: 0.0.40
codegen_flags: <defaults>
</compile_context>

<pallas_src>
import jax
import jax.numpy as jnp
from jax import lax
from jax.experimental import pallas as pl
from jax.experimental.pallas import tpu as pltpu


def _round_up(x, m):
    return (x + m - 1) // m * m


def _make_bd_tile_kernel(beta1, beta2, big_c, num_tiles, need_gate):
    beta1 = float(beta1)
    beta2 = float(beta2)
    big_c = float(big_c)
    half = num_tiles // 2

    def kernel(xr_ref, xc_ref, lr_ref, lc_ref, acc_ref):
        i = pl.program_id(0)    # row tile
        jj = pl.program_id(1)   # staggered column slot; column tile = (i + jj) % num_tiles

        # Per-row-tile partial accumulators (SMEM): [sum sp (all), sum sp (positives)].
        @pl.when(jj == 0)
        def _init():
            acc_ref[0, 0] = jnp.float32(0.0)
            acc_ref[0, 1] = jnp.float32(0.0)

        def _compute():
            xr = xr_ref[...]                       # (tile, Dp), pre-normalized in wrapper
            xc = xc_ref[...]                       # (tile, Dp), pre-normalized in wrapper

            # sim = xr @ xc.T — contract dim 1 with dim 1, no transpose / XLU pass.
            sim = lax.dot_general(
                xr, xc, dimension_numbers=(((1,), (1,)), ((), ())),
                preferred_element_type=jnp.float32)            # (tile, tile) f32

            # Pairwise label equality: (tile,1) vs (1,tile) broadcast compare (pure VPU).
            eq = lr_ref[...] == lc_ref[...]                     # (tile, tile) bool

            # cons = -1*pos + C*neg  folded into a single select.
            coef = jnp.where(eq, jnp.float32(-beta1), jnp.float32(beta1 * big_c))
            act = coef * (sim - jnp.float32(beta2))

            # Numerically stable softplus: log(exp(act) + 1).
            sp = jnp.maximum(act, 0.0) + jnp.log(1.0 + jnp.exp(-jnp.abs(act)))

            # Diagonal tiles (jj == 0) counted once; off-diagonal tiles stand for both
            # (i, j) and (j, i) — sim and eq are symmetric — so count them twice.
            scale = jnp.where(jj == 0, jnp.float32(1.0), jnp.float32(2.0))
            acc_ref[0, 0] += scale * jnp.sum(sp)
            acc_ref[0, 1] += scale * jnp.sum(jnp.where(eq, sp, jnp.float32(0.0)))

        if need_gate:
            # Even number of tiles: the wrap-around column jj == num_tiles//2 pairs each
            # row tile with its antipode; visit it only from the lower half of the rows.
            pl.when(jnp.logical_or(jj != half, i < half))(_compute)
        else:
            _compute()

    return kernel


def bd_loss_pallas(batch, labels, bd_loss_param=(2.0, 0.5, 25.0),
                   matmul_dtype=None, tile=None):
    """Pallas-backed bd_loss(batch, batch, pos_mask(labels), neg_mask(labels))."""
    beta1, beta2, big_c = bd_loss_param
    n, d = batch.shape
    x = batch.astype(jnp.float32)
    labels = labels.astype(jnp.int32)

    # ---- one-shot wrapper-side preprocessing (O(N*D) / O(N log N)) ----------
    # F.normalize(x, p=2, dim=-1): done ONCE here, not per (i, j) tile in the grid.
    ssq = jnp.sum(x * x, axis=-1, keepdims=True)
    xn = x * lax.rsqrt(jnp.maximum(ssq, jnp.float32(1e-24)))
    if matmul_dtype is not None:
        xn = xn.astype(matmul_dtype)

    # sum(pos_mask) from class counts (sum of counts^2) — no N^2 pass, no in-kernel sum(eq).
    _, inv = jnp.unique(labels, return_inverse=True, size=n)
    counts = jnp.bincount(inv.reshape(-1), length=n).astype(jnp.float32)
    sum_pos = jnp.sum(counts * counts)
    sum_neg = jnp.float32(n * n) - sum_pos

    # ---- tiling --------------------------------------------------------------
    d_pad = _round_up(d, 128)                 # lane-align the contraction dim (zeros are inert)
    if tile is None:
        if n <= 512:
            tile = _round_up(max(n, 8), 8)    # single tile
        elif d_pad <= 1024:
            tile = 512
        elif d_pad <= 4096:
            tile = 256
        else:
            tile = 128
    n_pad = _round_up(n, tile)
    # (8, 128) BlockSpec constraint for (tile, d_pad), (tile, 1) and (1, tile) blocks.
    assert tile % 8 == 0 and (tile % 128 == 0 or tile == n_pad), (tile, n_pad)

    if d_pad != d:
        xn = jnp.pad(xn, ((0, 0), (0, d_pad - d)))
    if n_pad != n:
        xn = jnp.pad(xn, ((0, n_pad - n), (0, 0)))                      # zero rows => sim == 0
        lab_row = jnp.pad(labels, (0, n_pad - n), constant_values=-1)   # sentinels never match
        lab_col = jnp.pad(labels, (0, n_pad - n), constant_values=-2)
    else:
        lab_row = labels
        lab_col = labels
    lab_row = lab_row.reshape(n_pad, 1)
    lab_col = lab_col.reshape(1, n_pad)

    gi = n_pad // tile            # square: row tiles == column tiles
    gj_half = gi // 2 + 1         # staggered columns: each unordered tile pair visited once
    need_gate = (gi % 2 == 0) and gi > 1

    kernel = _make_bd_tile_kernel(beta1, beta2, big_c, gi, need_gate)

    x_bytes = jnp.dtype(xn.dtype).itemsize
    cost = pl.CostEstimate(
        flops=int(gi * gj_half * tile * tile * (2 * d_pad + 12)),
        transcendentals=int(2 * gi * gj_half * tile * tile),
        # xr re-fetched once per row tile; xc once per grid step; labels + partials tiny.
        bytes_accessed=int(x_bytes * tile * d_pad * (gi + gi * gj_half) + 12 * n_pad + 8 * gi),
    )

    acc = pl.pallas_call(
        kernel,
        out_shape=jax.ShapeDtypeStruct((gi, 2), jnp.float32),
        grid=(gi, gj_half),
        in_specs=[
            pl.BlockSpec((tile, d_pad), lambda i, jj: (i, 0)),                # row block of xn
            pl.BlockSpec((tile, d_pad), lambda i, jj: ((i + jj) % gi, 0)),    # staggered col block
            pl.BlockSpec((tile, 1), lambda i, jj: (i, 0)),                    # row labels (N,1)
            pl.BlockSpec((1, tile), lambda i, jj: (0, (i + jj) % gi)),        # col labels (1,N)
        ],
        out_specs=pl.BlockSpec((1, 2), lambda i, jj: (i, 0),
                               memory_space=pltpu.MemorySpace.SMEM),
        compiler_params=pltpu.CompilerParams(
            dimension_semantics=("parallel", "arbitrary"),   # row tiles split across TCs on v7x
            vmem_limit_bytes=32 * 1024 * 1024,
        ),
        cost_estimate=cost,
    )(xn, xn, lab_row, lab_col)

    sp_all = jnp.sum(acc[:, 0])
    sp_pos = jnp.sum(acc[:, 1])
    eps = jnp.float32(1e-5)
    return (sp_pos / jnp.maximum(eps, sum_pos)
            + (sp_all - sp_pos) / jnp.maximum(eps, sum_neg))


def criterion_forward(batch, labels, lam_emb=1.0, lam_div=1.0,
                      bd_loss_param=(2.0, 0.5, 25.0)):
    """JAX/Pallas equivalent of Criterion.forward. Returns (loss, loss_emb, loss_div)."""
    if batch.ndim == 3:
        _, k, _ = batch.shape
        loss_emb = jnp.float32(0.0)
        for i in range(k):
            loss_emb = loss_emb + bd_loss_pallas(batch[:, i, :], labels, bd_loss_param)
        loss_emb = loss_emb / jnp.float32(k)
        loss_div = jnp.float32(0.0)   # TODO(synk): external diversity regularizer not provided.
    else:
        loss_emb = bd_loss_pallas(batch, labels, bd_loss_param)
        loss_div = jnp.float32(0.0)
    loss = lam_emb * loss_emb + lam_div * loss_div
    return loss, loss_emb, loss_div


def _reference(batch, labels, bd_loss_param=(2.0, 0.5, 25.0)):
    """Pure-JAX reference mirroring the PyTorch bd_loss math exactly."""
    beta1, beta2, C = bd_loss_param
    x = batch.astype(jnp.float32)
    nx = x / jnp.maximum(jnp.linalg.norm(x, axis=-1, keepdims=True), 1e-12)
    sim = nx @ nx.T
    eq = (labels[:, None] == labels[None, :]).astype(jnp.float32)
    pos, neg = eq, 1.0 - eq
    cons = -1.0 * pos + C * neg
    act = beta1 * (sim - beta2) * cons
    norm_mask = pos / jnp.maximum(1e-5, pos.sum()) + neg / jnp.maximum(1e-5, neg.sum())
    return jnp.sum(jnp.log(jnp.exp(act) + 1.0) * norm_mask)


if __name__ == "__main__":
    key = jax.random.PRNGKey(0)
    ks = jax.random.split(key, 8)

    # 1) Tiny single-tile case consistent with the module: (N samples, D embedding dim).
    N, D = 8, 32
    batch = jax.random.normal(ks[0], (N, D), dtype=jnp.float32)
    labels = jax.random.randint(ks[1], (N,), 0, 4, dtype=jnp.int32)
    loss, loss_emb, loss_div = criterion_forward(batch, labels, lam_emb=1.0, lam_div=1.0)
    loss = jax.block_until_ready(loss)
    ref = _reference(batch, labels)
    assert jnp.allclose(loss_emb, ref, rtol=1e-5, atol=1e-5), (loss_emb, ref)

    # 2) Padding / sentinel-mask path (N not a sublane multiple).
    N2, D2 = 12, 32
    batch2 = jax.random.normal(ks[2], (N2, D2), dtype=jnp.float32)
    labels2 = jax.random.randint(ks[3], (N2,), 0, 3, dtype=jnp.int32)
    loss2, loss_emb2, _ = criterion_forward(batch2, labels2, lam_emb=1.0, lam_div=1.0)
    loss2 = jax.block_until_ready(loss2)
    ref2 = _reference(batch2, labels2)
    assert jnp.allclose(loss_emb2, ref2, rtol=1e-5, atol=1e-5), (loss_emb2, ref2)

    # 3) Multi-tile symmetric path, ODD tile count (no wrap-around gate), N and D padded.
    N3, D3 = 300, 48
    batch3 = jax.random.normal(ks[4], (N3, D3), dtype=jnp.float32)
    labels3 = jax.random.randint(ks[5], (N3,), 0, 8, dtype=jnp.int32)
    loss3 = jax.block_until_ready(bd_loss_pallas(batch3, labels3, tile=128))
    ref3 = _reference(batch3, labels3)
    assert jnp.allclose(loss3, ref3, rtol=1e-4, atol=1e-4), (loss3, ref3)

    # 4) Multi-tile symmetric path, EVEN tile count (exercises the wrap-around gate).
    N4, D4 = 500, 40
    batch4 = jax.random.normal(ks[6], (N4, D4), dtype=jnp.float32)
    labels4 = jax.random.randint(ks[7], (N4,), 0, 6, dtype=jnp.int32)
    loss4 = jax.block_until_ready(bd_loss_pallas(batch4, labels4, tile=128))
    ref4 = _reference(batch4, labels4)
    assert jnp.allclose(loss4, ref4, rtol=1e-4, atol=1e-4), (loss4, ref4)

    print("KERNEL_OK")
</pallas_src>

<mosaic_0001>
module attributes {stable_mosaic.version = 11 : i64} {
  func.func @kernel(%arg0: i32, %arg1: i32, %arg2: memref<8x128xf32, #tpu.memory_space<vmem>>, %arg3: memref<8x128xf32, #tpu.memory_space<vmem>>, %arg4: memref<8x1xi32, #tpu.memory_space<vmem>>, %arg5: memref<1x8xi32, #tpu.memory_space<vmem>>, %arg6: memref<1x2xf32, #tpu.memory_space<smem>>) attributes {dimension_semantics = [#tpu.dimension_semantics<parallel>, #tpu.dimension_semantics<arbitrary>], iteration_bounds = array<i64: 1, 1>, scalar_prefetch = 0 : i64, scratch_operands = 0 : i64, tpu.core_type = #tpu.core_type<tc>, window_params = [{transform_indices = @transform_0, window_bounds = array<i64: 8, 128>}, {transform_indices = @transform_1, window_bounds = array<i64: 8, 128>}, {transform_indices = @transform_2, window_bounds = array<i64: 8, 1>}, {transform_indices = @transform_3, window_bounds = array<i64: 1, 8>}, {transform_indices = @transform_4, window_bounds = array<i64: 1, 2>}]} {
    %c0_i32 = arith.constant 0 : i32
    %0 = arith.cmpi eq, %arg1, %c0_i32 : i32
    %1 = arith.extui %0 : i1 to i32
    %c0_i32_0 = arith.constant 0 : i32
    %2 = arith.cmpi ne, %1, %c0_i32_0 : i32
    scf.if %2 {
      %cst_27 = arith.constant 0.000000e+00 : f32
      %c0_28 = arith.constant 0 : index
      %c0_29 = arith.constant 0 : index
      %47 = memref.load %arg6[%c0_28, %c0_29] : memref<1x2xf32, #tpu.memory_space<smem>>
      memref.store %cst_27, %arg6[%c0_28, %c0_29] : memref<1x2xf32, #tpu.memory_space<smem>>
      %cst_30 = arith.constant 0.000000e+00 : f32
      %c0_31 = arith.constant 0 : index
      %c1_32 = arith.constant 1 : index
      %48 = memref.load %arg6[%c0_31, %c1_32] : memref<1x2xf32, #tpu.memory_space<smem>>
      memref.store %cst_30, %arg6[%c0_31, %c1_32] : memref<1x2xf32, #tpu.memory_space<smem>>
    } else {
    }
    %c0 = arith.constant 0 : index
    %c0_1 = arith.constant 0 : index
    %3 = vector.load %arg2[%c0, %c0_1] : memref<8x128xf32, #tpu.memory_space<vmem>>, vector<8x128xf32>
    %c0_2 = arith.constant 0 : index
    %c0_3 = arith.constant 0 : index
    %4 = vector.load %arg3[%c0_2, %c0_3] : memref<8x128xf32, #tpu.memory_space<vmem>>, vector<8x128xf32>
    %cst = arith.constant dense<0.000000e+00> : vector<8x8xf32>
    %5 = tpu.matmul %3, %4, %cst {dimension_numbers = #tpu.dot_dimension_numbers<[1], [1], [0], [0], [0, 0, 1, 0], [], []>} : vector<8x128xf32>, vector<8x128xf32>, vector<8x8xf32> -> vector<8x8xf32>
    %c0_4 = arith.constant 0 : index
    %c0_5 = arith.constant 0 : index
    %6 = vector.load %arg4[%c0_4, %c0_5] : memref<8x1xi32, #tpu.memory_space<vmem>>, vector<8x1xi32>
    %c0_6 = arith.constant 0 : index
    %c0_7 = arith.constant 0 : index
    %7 = vector.load %arg5[%c0_6, %c0_7] : memref<1x8xi32, #tpu.memory_space<vmem>>, vector<1x8xi32>
    %8 = vector.broadcast %6 : vector<8x1xi32> to vector<8x8xi32>
    %9 = vector.broadcast %7 : vector<1x8xi32> to vector<8x8xi32>
    %10 = arith.cmpi eq, %8, %9 : vector<8x8xi32>
    %cst_8 = arith.constant -2.000000e+00 : f32
    %cst_9 = arith.constant 5.000000e+01 : f32
    %11 = vector.broadcast %cst_8 : f32 to vector<8x8xf32>
    %12 = vector.broadcast %cst_9 : f32 to vector<8x8xf32>
    %13 = arith.select %10, %11, %12 : vector<8x8xi1>, vector<8x8xf32>
    %cst_10 = arith.constant 5.000000e-01 : f32
    %14 = vector.broadcast %cst_10 : f32 to vector<8x8xf32>
    %15 = arith.subf %5, %14 : vector<8x8xf32>
    %16 = arith.mulf %13, %15 : vector<8x8xf32>
    %cst_11 = arith.constant 0.000000e+00 : f32
    %17 = vector.broadcast %cst_11 : f32 to vector<8x8xf32>
    %18 = arith.maximumf %16, %17 : vector<8x8xf32>
    %19 = math.absf %16 : vector<8x8xf32>
    %cst_12 = arith.constant 0.000000e+00 : f32
    %20 = vector.broadcast %cst_12 : f32 to vector<8x8xf32>
    %21 = arith.subf %20, %19 : vector<8x8xf32>
    %22 = math.exp %21 : vector<8x8xf32>
    %cst_13 = arith.constant 1.000000e+00 : f32
    %23 = vector.broadcast %cst_13 : f32 to vector<8x8xf32>
    %24 = arith.addf %23, %22 : vector<8x8xf32>
    %25 = math.log %24 : vector<8x8xf32>
    %26 = arith.addf %18, %25 : vector<8x8xf32>
    %c0_i32_14 = arith.constant 0 : i32
    %27 = arith.cmpi eq, %arg1, %c0_i32_14 : i32
    %cst_15 = arith.constant 1.000000e+00 : f32
    %cst_16 = arith.constant 2.000000e+00 : f32
    %28 = arith.select %27, %cst_15, %cst_16 : f32
    %c0_17 = arith.constant 0 : index
    %c0_18 = arith.constant 0 : index
    %29 = memref.load %arg6[%c0_17, %c0_18] : memref<1x2xf32, #tpu.memory_space<smem>>
    %30 = vector.shape_cast %26 : vector<8x8xf32> to vector<1x8x8xf32>
    %cst_19 = arith.constant dense<0.000000e+00> : vector<1xf32>
    %31 = vector.multi_reduction <add>, %30, %cst_19 [1, 2] : vector<1x8x8xf32> to vector<1xf32>
    %32 = vector.shape_cast %31 : vector<1xf32> to vector<1x1x1xf32>
    %33 = vector.extract %32[0, 0, 0] : f32 from vector<1x1x1xf32>
    %34 = arith.mulf %28, %33 : f32
    %35 = arith.addf %29, %34 : f32
    %c0_20 = arith.constant 0 : index
    %c0_21 = arith.constant 0 : index
    %36 = memref.load %arg6[%c0_20, %c0_21] : memref<1x2xf32, #tpu.memory_space<smem>>
    memref.store %35, %arg6[%c0_20, %c0_21] : memref<1x2xf32, #tpu.memory_space<smem>>
    %c0_22 = arith.constant 0 : index
    %c1 = arith.constant 1 : index
    %37 = memref.load %arg6[%c0_22, %c1] : memref<1x2xf32, #tpu.memory_space<smem>>
    %cst_23 = arith.constant 0.000000e+00 : f32
    %38 = vector.broadcast %cst_23 : f32 to vector<8x8xf32>
    %39 = arith.select %10, %26, %38 : vector<8x8xi1>, vector<8x8xf32>
    %40 = vector.shape_cast %39 : vector<8x8xf32> to vector<1x8x8xf32>
    %cst_24 = arith.constant dense<0.000000e+00> : vector<1xf32>
    %41 = vector.multi_reduction <add>, %40, %cst_24 [1, 2] : vector<1x8x8xf32> to vector<1xf32>
    %42 = vector.shape_cast %41 : vector<1xf32> to vector<1x1x1xf32>
    %43 = vector.extract %42[0, 0, 0] : f32 from vector<1x1x1xf32>
    %44 = arith.mulf %28, %43 : f32
    %45 = arith.addf %37, %44 : f32
    %c0_25 = arith.constant 0 : index
    %c1_26 = arith.constant 1 : index
    %46 = memref.load %arg6[%c0_25, %c1_26] : memref<1x2xf32, #tpu.memory_space<smem>>
    memref.store %45, %arg6[%c0_25, %c1_26] : memref<1x2xf32, #tpu.memory_space<smem>>
    return
  }
  func.func @transform_0(%arg0: i32, %arg1: i32) -> (i32, i32) {
    %c0_i32 = arith.constant 0 : i32
    %c0_i32_0 = arith.constant 0 : i32
    return %arg0, %c0_i32 : i32, i32
  }
  func.func @transform_1(%arg0: i32, %arg1: i32) -> (i32, i32) {
    %0 = arith.addi %arg0, %arg1 : i32
    %c1_i32 = arith.constant 1 : i32
    %c0_i32 = arith.constant 0 : i32
    %1 = arith.cmpi eq, %c1_i32, %c0_i32 : i32
    %c1_i32_0 = arith.constant 1 : i32
    %2 = arith.select %1, %c1_i32_0, %c1_i32 : i32
    %3 = arith.remsi %0, %2 : i32
    %c0_i32_1 = arith.constant 0 : i32
    %4 = arith.cmpi ne, %3, %c0_i32_1 : i32
    %c0_i32_2 = arith.constant 0 : i32
    %5 = arith.cmpi slt, %3, %c0_i32_2 : i32
    %c0_i32_3 = arith.constant 0 : i32
    %6 = arith.cmpi slt, %2, %c0_i32_3 : i32
    %7 = arith.xori %5, %6 : i1
    %8 = arith.andi %7, %4 : i1
    %9 = arith.addi %3, %2 : i32
    %10 = arith.select %8, %9, %3 : i32
    %c0_i32_4 = arith.constant 0 : i32
    %c0_i32_5 = arith.constant 0 : i32
    return %10, %c0_i32_4 : i32, i32
  }
  func.func @transform_2(%arg0: i32, %arg1: i32) -> (i32, i32) {
    %c0_i32 = arith.constant 0 : i32
    %c0_i32_0 = arith.constant 0 : i32
    return %arg0, %c0_i32 : i32, i32
  }
  func.func @transform_3(%arg0: i32, %arg1: i32) -> (i32, i32) {
    %0 = arith.addi %arg0, %arg1 : i32
    %c1_i32 = arith.constant 1 : i32
    %c0_i32 = arith.constant 0 : i32
    %1 = arith.cmpi eq, %c1_i32, %c0_i32 : i32
    %c1_i32_0 = arith.constant 1 : i32
    %2 = arith.select %1, %c1_i32_0, %c1_i32 : i32
    %3 = arith.remsi %0, %2 : i32
    %c0_i32_1 = arith.constant 0 : i32
    %4 = arith.cmpi ne, %3, %c0_i32_1 : i32
    %c0_i32_2 = arith.constant 0 : i32
    %5 = arith.cmpi slt, %3, %c0_i32_2 : i32
    %c0_i32_3 = arith.constant 0 : i32
    %6 = arith.cmpi slt, %2, %c0_i32_3 : i32
    %7 = arith.xori %5, %6 : i1
    %8 = arith.andi %7, %4 : i1
    %9 = arith.addi %3, %2 : i32
    %10 = arith.select %8, %9, %3 : i32
    %c0_i32_4 = arith.constant 0 : i32
    %c0_i32_5 = arith.constant 0 : i32
    return %c0_i32_4, %10 : i32, i32
  }
  func.func @transform_4(%arg0: i32, %arg1: i32) -> (i32, i32) {
    %c0_i32 = arith.constant 0 : i32
    %c0_i32_0 = arith.constant 0 : i32
    return %arg0, %c0_i32 : i32, i32
  }
}

</mosaic_0001>

<llo_original>
// kernel: tpu_custom_call.1
$region0: #{tpu_custom_call.1}
  #allocation0 [shape = 'u32[]', space=smem, size = 0x4, offset = 0x4, fixed_abs, tag = 'smem constant byte address 0x4 - core index']
  #allocation1 [shape = 'u32[144,128]{1,0:T(1,128)}', space=vmem, size = 0x12000, scoped, tag = 'internal scratch']
  %s0 = inlined_call_operand.vmem [shape: f32[8,128], index: 0, kind: input, shape index: {}]
  %s1 = inlined_call_operand.hbm [shape: f32[8,128], index: 1, kind: input, shape index: {}]
  %s2 = inlined_call_operand.vmem [shape: s32[8,1], index: 2, kind: input, shape index: {}]
  %s3 = inlined_call_operand.vmem [shape: s32[1,8], index: 3, kind: input, shape index: {}]
  %s4 = inlined_call_operand.hbm [shape: f32[1,2], index: 4, kind: output, shape index: {}]
  %s5 = sld [smem:[#allocation0]]
  $region34: #{tpu_custom_call.1} parent=0
    _
  %s7 = ssub.s32 1, %s5
  %s8 = scalar_select 0, %s7, %s5
  $region1: #{tpu_custom_call.1} parent=0
    #allocation2 [shape = 'u8[4096]{0}', space=vmem, size = 0x1000, scoped, tag = 'input window, operand 1, single buffered']
    #allocation3 [shape = 's32[1]{0}', space=sflag, size = 0x4, scoped, tag = 'scoped memory for tpu_custom_call.1']
    #allocation4 [shape = 's32[1]{0}', space=sflag, size = 0x4, scoped, tag = 'scoped memory for tpu_custom_call.1']
    #allocation5 [shape = 'u8[512]{0}', space=smem, size = 0x200, scoped, tag = 'output window, operand 0, single buffered']
    %9 = vsyncpa [#allocation3], 0
    %10 = vsyncpa [#allocation4], 0
    // Predicated region
    $region2: #{tpu_custom_call.1} parent=1 // pred_check
      _
    $region3: #{tpu_custom_call.1} parent=1 // pred_check_branch
      %12 = sbr.rel (0) target = $region5
    $region4: #{tpu_custom_call.1} parent=1 // pred_region
      _
    $region5: #{tpu_custom_call.1} parent=1 // pred_fallthru
      _
    // Predicated region
    $region6: #{tpu_custom_call.1} parent=1 // pred_check
      _
    $region7: #{tpu_custom_call.1} parent=1 // pred_check_branch
      %14 = sbr.rel (0) target = $region9
    $region8: #{tpu_custom_call.1} parent=1 // pred_region
      %s16 = ssub.s32 128, 128
      %17 = vsyncadd [#allocation3], %s16
      %s19 = sshll.u32 [#allocation2], 4
      %s20 = int_to_ptr.vmem [resolvable:$true] %s19
      %22 = dma.hbm_to_vmem [thread:$0]  %s1, 128, %s20, [#allocation3]
    $region9: #{tpu_custom_call.1} parent=1 // pred_fallthru
      _
    // Predicated region
    $region10: #{tpu_custom_call.1} parent=1 // pred_check
      _
    $region11: #{tpu_custom_call.1} parent=1 // pred_check_branch
      %24 = sbr.rel (0) target = $region13
    $region12: #{tpu_custom_call.1} parent=1 // pred_region
      _
    $region13: #{tpu_custom_call.1} parent=1 // pred_fallthru
      _
    // Predicated region
    $region14: #{tpu_custom_call.1} parent=1 // pred_check
      _
    $region15: #{tpu_custom_call.1} parent=1 // pred_check_branch
      %26 = sbr.rel (0) target = $region17
    $region16: #{tpu_custom_call.1} parent=1 // pred_region
      _
    $region17: #{tpu_custom_call.1} parent=1 // pred_fallthru
      _
    // Predicated region
    $region18: #{tpu_custom_call.1} parent=1 // pred_check
      _
    $region19: #{tpu_custom_call.1} parent=1 // pred_check_branch
      %28 = sbr.rel (0) target = $region21
    $region20: #{tpu_custom_call.1} parent=1 // pred_region
      %29 = dma.done [#allocation3], 128
    $region21: #{tpu_custom_call.1} parent=1 // pred_fallthru
      _
    %p30 = scmp.eq.s32.totalorder 0, 0
    // Predicated region
    $region22: #{tpu_custom_call.1} parent=1 // pred_check
      %p31 = pneg %p30
    $region23: #{tpu_custom_call.1} parent=1 // pred_check_branch
      %33 = sbr.rel (%p31) target = $region25
    $region24: #{tpu_custom_call.1} parent=1 // pred_region
      %s34 = scalar_lea.smem [#allocation5], 0
      %35 = sst [smem:[%s34]] 0.0
      %s36 = scalar_lea.smem [#allocation5], 1
      %37 = sst [smem:[%s36]] 0.0
    $region25: #{tpu_custom_call.1} parent=1 // pred_fallthru
      _
    %v38 = vld [vmem:[%s0] sm:$0xff]
    %v39 = vld [vmem:[#allocation2] sm:$0xff]
    %40 = vmatprep.subr.mxu0 0.0
    %41 = vmatpush1.xpose.msra.mxu0 %v39
    %42 = vmatprep.subr.mxu0 0.0
    %43 = vmatpush1.xpose.msra.mxu0 0.0
    %44 = vmatprep.subr.mxu0 0.0
    %45 = vmatpush1.xpose.msra.mxu0 0.0
    %46 = vmatprep.subr.mxu0 0.0
    %47 = vmatpush1.xpose.msra.mxu0 0.0
    %48 = vmatprep.subr.mxu0 0.0
    %49 = vmatpush1.xpose.msra.mxu0 0.0
    %50 = vmatprep.subr.mxu0 0.0
    %51 = vmatpush1.xpose.msra.mxu0 0.0
    %52 = vmatprep.subr.mxu0 0.0
    %53 = vmatpush1.xpose.msra.mxu0 0.0
    %54 = vmatprep.subr.mxu0 0.0
    %55 = vmatpush1.xpose.msra.mxu0 0.0
    %56 = vmatprep.subr.mxu0 0.0
    %57 = vmatpush1.xpose.msra.mxu0 0.0
    %58 = vmatprep.subr.mxu0 0.0
    %59 = vmatpush1.xpose.msra.mxu0 0.0
    %60 = vmatprep.subr.mxu0 0.0
    %61 = vmatpush1.xpose.msra.mxu0 0.0
    %62 = vmatprep.subr.mxu0 0.0
    %63 = vmatpush1.xpose.msra.mxu0 0.0
    %64 = vmatprep.subr.mxu0 0.0
    %65 = vmatpush1.xpose.msra.mxu0 0.0
    %66 = vmatprep.subr.mxu0 0.0
    %67 = vmatpush1.xpose.msra.mxu0 0.0
    %68 = vmatprep.subr.mxu0 0.0
    %69 = vmatpush1.xpose.msra.mxu0 0.0
    %70 = vmatprep.subr.mxu0 0.0
    %71 = vmatpush1.xpose.msra.mxu0 0.0
    %72 = vmatprep.subr.mxu0 0.0
    %73 = vmatpush1.xpose.msra.mxu0 0.0
    %74 = vmatprep.subr.mxu0 0.0
    %75 = vmatpush1.xpose.msra.mxu0 0.0
    %76 = vmatprep.subr.mxu0 0.0
    %77 = vmatpush1.xpose.msra.mxu0 0.0
    %78 = vmatprep.subr.mxu0 0.0
    %79 = vmatpush1.xpose.msra.mxu0 0.0
    %80 = vmatprep.subr.mxu0 0.0
    %81 = vmatpush1.xpose.msra.mxu0 0.0
    %82 = vmatprep.subr.mxu0 0.0
    %83 = vmatpush1.xpose.msra.mxu0 0.0
    %84 = vmatprep.subr.mxu0 0.0
    %85 = vmatpush1.xpose.msra.mxu0 0.0
    %86 = vmatprep.subr.mxu0 0.0
    %87 = vmatpush1.xpose.msra.mxu0 0.0
    %88 = vmatprep.subr.mxu0 0.0
    %89 = vmatpush1.xpose.msra.mxu0 0.0
    %90 = vmatprep.subr.mxu0 0.0
    %91 = vmatpush1.xpose.msra.mxu0 0.0
    %92 = vmatprep.subr.mxu0 0.0
    %93 = vmatpush1.xpose.msra.mxu0 0.0
    %94 = vmatprep.subr.mxu0 0.0
    %95 = vmatpush1.xpose.msra.mxu0 0.0
    %96 = vmatprep.subr.mxu0 0.0
    %97 = vmatpush1.xpose.msra.mxu0 0.0
    %98 = vmatprep.subr.mxu0 0.0
    %99 = vmatpush1.xpose.msra.mxu0 0.0
    %100 = vmatprep.subr.mxu0 0.0
    %101 = vmatpush1.xpose.msra.mxu0 0.0
    %102 = vmatprep.subr.mxu0 0.0
    %103 = vmatpush1.xpose.msra.mxu0 0.0
    %104 = vmatprep.mubr.f32.mxu0 0.0
    %105 = vmatmul.mubr.f32.gmra.mrb[0].mxu0 %v38
    %v106 = vpop.f32.mrb[0].mxu0
    %v107 = vadd.f32 0.0, %v106
    %v108 = vpop.f32.mrb[0].mxu0
    %109 = vdwg.mxu0
    %v110 = vld [vmem:[%s2] sm:$0xff]
    %v111 = vld [vmem:[%s3] sm:$0x1]
    %112 = vset.pattern.permute.xlu0 0
    %113 = vperm.xlu0 %112, %v110
    %v114 = vpop.permute.xlu0 %113
    %v115 = vlaneseq
    %v116 = vshrl.u32 %v115, 7
    %v117 = vsub.s32 0, %v116
    %v118 = vrot.slane %v111, %v117
    %vm119 = vcmp.eq.s32.totalorder %v114, %v118
    %v120 = vsel %vm119, -2.0, 50.0
    %v121 = vsub.f32 %v107, 0.5
    %v122 = vmul.f32 %v120, %v121
    %v123 = vmax.f32 %v122, 0.0
    %v124 = vand.u32 2147483647, %v122
    %v125 = vsub.f32 0.0, %v124
    %v126 = vmul.f32 %v125, 1.442695
    %v127 = vpow.pop %v126
    %v128 = vadd.f32 %v127, 1.0
    %v129 = vlog2.pop %v128
    %v130 = vmul.f32 %v129, 0.6931472
    %v131 = vadd.f32 %v123, %v130
    %s132 = scalar_select %p30, 1.0, 2.0
    %s133 = sld [smem:[#allocation5]]
    %vm134 = vcmask 64512
    %v135 = vsel %vm134, %v131, 0.0
    %136 = vadd.xlane.f32.xlu0 %v135
    %v137 = vpop.xlane.xlu0 %136
    %v138 = vrot.slane %v137, 4
    %v139 = vadd.f32 %v137, %v138
    %v140 = vrot.slane %v139, 2
    %v141 = vadd.f32 %v139, %v140
    %v142 = vrot.slane %v141, 1
    %v143 = vadd.f32 %v141, %v142
    %s144 = vtos %v143
    %s145 = smul.f32 %s132, %s144
    %s146 = sadd.f32 %s133, %s145
    %s147 = scalar_lea.smem [#allocation5], 0
    %148 = sst [smem:[%s147]] %s146
    %s149 = sld [smem:[#allocation5 + $0x1]]
    %v150 = vsel %vm119, %v131, 0.0
    %v151 = vsel %vm134, %v150, 0.0
    %152 = vadd.xlane.f32.xlu0 %v151
    %v153 = vpop.xlane.xlu0 %152
    %v154 = vrot.slane %v153, 4
    %v155 = vadd.f32 %v153, %v154
    %v156 = vrot.slane %v155, 2
    %v157 = vadd.f32 %v155, %v156
    %v158 = vrot.slane %v157, 1
    %v159 = vadd.f32 %v157, %v158
    %s160 = vtos %v159
    %s161 = smul.f32 %s132, %s160
    %s162 = sadd.f32 %s149, %s161
    %s163 = scalar_lea.smem [#allocation5], 1
    %164 = sst [smem:[%s163]] %s162
    // Predicated region
    $region26: #{tpu_custom_call.1} parent=1 // pred_check
      _
    $region27: #{tpu_custom_call.1} parent=1 // pred_check_branch
      %166 = sbr.rel (0) target = $region29
    $region28: #{tpu_custom_call.1} parent=1 // pred_region
      %s168 = ssub.s32 16, 16
      %169 = vsyncadd [#allocation4], %s168
      %172 = dma.smem_to_hbm [#allocation5], 16, %s4, [#allocation4]
    $region29: #{tpu_custom_call.1} parent=1 // pred_fallthru
      _
    // Predicated region
    $region30: #{tpu_custom_call.1} parent=1 // pred_check
      _
    $region31: #{tpu_custom_call.1} parent=1 // pred_check_branch
      %174 = sbr.rel (0) target = $region33
    $region32: #{tpu_custom_call.1} parent=1 // pred_region
      %175 = dma.done [#allocation4], 16
    $region33: #{tpu_custom_call.1} parent=1 // pred_fallthru
      _
    %176 = sfence
    %177 = vsyncpa [#allocation3], 1
    %178 = vsyncpa [#allocation4], 1

</llo_original>
